<compile_context>
chip_gen: v6e
topology: v6e:2x2x1
jax: 0.10.0
libtpu: 0.0.40
codegen_flags: <defaults>
</compile_context>

<pallas_src>
import math

import jax
import jax.numpy as jnp
from jax.experimental import pallas as pl
from jax.experimental.pallas import tpu as pltpu


def _embed_kernel(xT_ref, tab_ref, out_ref):
    # xT_ref : (G, B_tile)   int32 -- indices for the G features of this step
    # tab_ref: (G, C, D)     float -- their (padded) embedding tables
    # out_ref: (B_tile, G*D) float -- lane-dense output slab, final layout
    G, B = xT_ref.shape
    C = tab_ref.shape[1]
    # Hoisted: same iota for every feature in the group (no per-iter broadcast).
    iota_bc = jax.lax.broadcasted_iota(jnp.int32, (B, C), 1)
    cols = []
    for g in range(G):  # G is small and static -> unrolled at trace time
        idx = xT_ref[g, :]                                        # (B_tile,)
        onehot = (idx[:, None] == iota_bc).astype(tab_ref.dtype)  # (B_tile, C)
        cols.append(jnp.dot(onehot, tab_ref[g],                   # MXU matmul
                            preferred_element_type=jnp.float32))  # (B_tile, D)
    # Single full-width (lane-dense) store of the packed slab.
    out_ref[...] = jnp.concatenate(cols, axis=-1).astype(out_ref.dtype)


def _pick_feature_group(F, C, D, itemsize):
    """Features per grid step.

    All of them when the stacked table block is small; otherwise groups that
    are multiples of 8 (keeps the (G, B_tile) index block sublane-aligned),
    grown while the table block fits the VMEM budget, preferring a
    lane-aligned (multiple-of-128) output width G*D.
    """
    table_budget = 8 << 20  # bytes for one table block (pipeline double-buffers)
    if F <= 8 or F * C * D * itemsize <= table_budget:
        return F
    g = 8
    while (2 * g < F
           and 2 * g * C * D * itemsize <= table_budget
           and (g * D) % 128 != 0):
        g *= 2
    return g


def _pick_batch_tile(B, G, D, itemsize):
    """Batch rows per grid step: as large as possible (amortise per-step
    overhead) while the double-buffered output slab stays well inside VMEM."""
    if B <= 1024 or B % 128 != 0:
        return B
    slab_budget = 12 << 20
    for t in (2048, 1024, 512, 256, 128):
        if B % t == 0 and 2 * t * G * D * itemsize <= slab_budget:
            return t
    return 128


def categorical_embeddings_1d(x, tables):
    """x: (..., F) integer indices; tables: (F, C_pad, D) stacked padded tables.

    Returns (..., F, D), matching torch.stack([emb_i(x[..., i])], dim=-2).
    """
    *batch_shape, F = x.shape
    Ft, C, D = tables.shape
    assert Ft == F
    B = int(math.prod(batch_shape)) if batch_shape else 1
    itemsize = jnp.dtype(tables.dtype).itemsize

    G = _pick_feature_group(F, C, D, itemsize)
    F_pad = ((F + G - 1) // G) * G

    # Pad the batch to a lane multiple only when it must be tiled; a single
    # full-extent block is always (8,128)-legal otherwise.
    B_pad = B
    if B > 1024 and B % 128 != 0:
        B_pad = pl.cdiv(B, 128) * 128
    B_tile = _pick_batch_tile(B_pad, G, D, itemsize)

    # Index matrix is tiny (int32); feature-major layout keeps the per-step
    # index block sublane-aligned: block (G, B_tile).
    xT = jnp.transpose(x.reshape(B, F).astype(jnp.int32))  # (F, B)
    if F_pad != F:  # pad with dummy features (zero tables, index 0); sliced off
        xT = jnp.pad(xT, ((0, F_pad - F), (0, 0)))
        tables = jnp.pad(tables, ((0, F_pad - F), (0, 0), (0, 0)))
    if B_pad != B:
        xT = jnp.pad(xT, ((0, 0), (0, B_pad - B)))

    grid = (F_pad // G, B_pad // B_tile)  # batch innermost: table block reused

    out = pl.pallas_call(
        _embed_kernel,
        out_shape=jax.ShapeDtypeStruct((B_pad, F_pad * D), tables.dtype),
        grid=grid,
        in_specs=[
            pl.BlockSpec((G, B_tile), lambda f, b: (f, b)),   # per-step indices
            pl.BlockSpec((G, C, D), lambda f, b: (f, 0, 0)),  # per-group tables
        ],
        out_specs=pl.BlockSpec((B_tile, G * D), lambda f, b: (b, f)),
        compiler_params=pltpu.CompilerParams(
            dimension_semantics=("parallel", "parallel")),
    )(xT, tables)

    out = out.reshape(B_pad, F_pad, D)       # free contiguous reshape
    if B_pad != B:
        out = out[:B]
    if F_pad != F:
        out = out[:, :F, :]
    return out.reshape(*batch_shape, F, D)


def init_tables(cardinalities, d_embedding, key):
    """Deterministic _init_rsqrt_uniform_ init; tables padded to a common size.

    Padding rows are never indexed (valid indices are < c_i + 1)."""
    c_pad = max(cardinalities) + 1
    bound = 1.0 / math.sqrt(d_embedding)
    tabs = []
    for c in cardinalities:
        key, sub = jax.random.split(key)
        w = jax.random.uniform(sub, (c + 1, d_embedding), jnp.float32,
                               minval=-bound, maxval=bound)
        w = jnp.pad(w, ((0, c_pad - (c + 1)), (0, 0)))
        tabs.append(w)
    return jnp.stack(tabs, axis=0)  # (F, C_pad, D)


if __name__ == "__main__":
    key = jax.random.PRNGKey(0)
    cardinalities = [3, 5, 7, 4]
    d_embedding = 32
    batch = 8
    F = len(cardinalities)

    key, k_tab, k_x = jax.random.split(key, 3)
    tables = init_tables(cardinalities, d_embedding, k_tab)

    # x[..., i] in [0, cardinalities[i]] (nn.Embedding has c_i + 1 rows)
    cols = []
    for i, c in enumerate(cardinalities):
        k_x, sub = jax.random.split(k_x)
        cols.append(jax.random.randint(sub, (batch,), 0, c + 1, dtype=jnp.int32))
    x = jnp.stack(cols, axis=-1)  # (batch, F) int32

    out = categorical_embeddings_1d(x, tables)
    out = jax.block_until_ready(out)

    # pure-JAX reference: per-feature gather, stacked on dim -2
    ref = jnp.stack([tables[i][x[..., i]] for i in range(F)], axis=-2)
    assert out.shape == (batch, F, d_embedding), out.shape
    assert jnp.allclose(out, ref, atol=1e-6), "mismatch vs reference gather"

    print("KERNEL_OK")
</pallas_src>

<mosaic_0001>
module attributes {stable_mosaic.version = 11 : i64} {
  func.func @_embed_kernel(%arg0: i32, %arg1: i32, %arg2: memref<4x8xi32, #tpu.memory_space<vmem>>, %arg3: memref<4x8x32xf32, #tpu.memory_space<vmem>>, %arg4: memref<8x128xf32, #tpu.memory_space<vmem>>) attributes {dimension_semantics = [#tpu.dimension_semantics<parallel>, #tpu.dimension_semantics<parallel>], iteration_bounds = array<i64: 1, 1>, scalar_prefetch = 0 : i64, scratch_operands = 0 : i64, tpu.core_type = #tpu.core_type<tc>, window_params = [{transform_indices = @transform_0, window_bounds = array<i64: 4, 8>}, {transform_indices = @transform_1, window_bounds = array<i64: 4, 8, 32>}, {transform_indices = @transform_2, window_bounds = array<i64: 8, 128>}]} {
    %0 = tpu.iota {dimensions = array<i32: 1>} : vector<8x8xi32>
    %c0 = arith.constant 0 : index
    %c0_0 = arith.constant 0 : index
    %1 = vector.load %arg2[%c0, %c0_0] : memref<4x8xi32, #tpu.memory_space<vmem>>, vector<1x8xi32>
    %2 = vector.shape_cast %1 : vector<1x8xi32> to vector<8xi32>
    %3 = vector.shape_cast %2 : vector<8xi32> to vector<8x1xi32>
    %4 = vector.broadcast %3 : vector<8x1xi32> to vector<8x8xi32>
    %5 = arith.cmpi eq, %4, %0 : vector<8x8xi32>
    %6 = arith.extui %5 : vector<8x8xi1> to vector<8x8xi32>
    %7 = arith.sitofp %6 : vector<8x8xi32> to vector<8x8xf32>
    %c0_1 = arith.constant 0 : index
    %c0_2 = arith.constant 0 : index
    %c0_3 = arith.constant 0 : index
    %8 = vector.load %arg3[%c0_1, %c0_2, %c0_3] : memref<4x8x32xf32, #tpu.memory_space<vmem>>, vector<1x8x32xf32>
    %9 = vector.shape_cast %8 : vector<1x8x32xf32> to vector<8x32xf32>
    %cst = arith.constant dense<0.000000e+00> : vector<8x32xf32>
    %10 = tpu.matmul %7, %9, %cst {dimension_numbers = #tpu.dot_dimension_numbers<[1], [0], [0], [1], [0, 0, 1, 1], [], []>} : vector<8x8xf32>, vector<8x32xf32>, vector<8x32xf32> -> vector<8x32xf32>
    %c1 = arith.constant 1 : index
    %c0_4 = arith.constant 0 : index
    %11 = vector.load %arg2[%c1, %c0_4] : memref<4x8xi32, #tpu.memory_space<vmem>>, vector<1x8xi32>
    %12 = vector.shape_cast %11 : vector<1x8xi32> to vector<8xi32>
    %13 = vector.shape_cast %12 : vector<8xi32> to vector<8x1xi32>
    %14 = vector.broadcast %13 : vector<8x1xi32> to vector<8x8xi32>
    %15 = arith.cmpi eq, %14, %0 : vector<8x8xi32>
    %16 = arith.extui %15 : vector<8x8xi1> to vector<8x8xi32>
    %17 = arith.sitofp %16 : vector<8x8xi32> to vector<8x8xf32>
    %c1_5 = arith.constant 1 : index
    %c0_6 = arith.constant 0 : index
    %c0_7 = arith.constant 0 : index
    %18 = vector.load %arg3[%c1_5, %c0_6, %c0_7] : memref<4x8x32xf32, #tpu.memory_space<vmem>>, vector<1x8x32xf32>
    %19 = vector.shape_cast %18 : vector<1x8x32xf32> to vector<8x32xf32>
    %cst_8 = arith.constant dense<0.000000e+00> : vector<8x32xf32>
    %20 = tpu.matmul %17, %19, %cst_8 {dimension_numbers = #tpu.dot_dimension_numbers<[1], [0], [0], [1], [0, 0, 1, 1], [], []>} : vector<8x8xf32>, vector<8x32xf32>, vector<8x32xf32> -> vector<8x32xf32>
    %c2 = arith.constant 2 : index
    %c0_9 = arith.constant 0 : index
    %21 = vector.load %arg2[%c2, %c0_9] : memref<4x8xi32, #tpu.memory_space<vmem>>, vector<1x8xi32>
    %22 = vector.shape_cast %21 : vector<1x8xi32> to vector<8xi32>
    %23 = vector.shape_cast %22 : vector<8xi32> to vector<8x1xi32>
    %24 = vector.broadcast %23 : vector<8x1xi32> to vector<8x8xi32>
    %25 = arith.cmpi eq, %24, %0 : vector<8x8xi32>
    %26 = arith.extui %25 : vector<8x8xi1> to vector<8x8xi32>
    %27 = arith.sitofp %26 : vector<8x8xi32> to vector<8x8xf32>
    %c2_10 = arith.constant 2 : index
    %c0_11 = arith.constant 0 : index
    %c0_12 = arith.constant 0 : index
    %28 = vector.load %arg3[%c2_10, %c0_11, %c0_12] : memref<4x8x32xf32, #tpu.memory_space<vmem>>, vector<1x8x32xf32>
    %29 = vector.shape_cast %28 : vector<1x8x32xf32> to vector<8x32xf32>
    %cst_13 = arith.constant dense<0.000000e+00> : vector<8x32xf32>
    %30 = tpu.matmul %27, %29, %cst_13 {dimension_numbers = #tpu.dot_dimension_numbers<[1], [0], [0], [1], [0, 0, 1, 1], [], []>} : vector<8x8xf32>, vector<8x32xf32>, vector<8x32xf32> -> vector<8x32xf32>
    %c3 = arith.constant 3 : index
    %c0_14 = arith.constant 0 : index
    %31 = vector.load %arg2[%c3, %c0_14] : memref<4x8xi32, #tpu.memory_space<vmem>>, vector<1x8xi32>
    %32 = vector.shape_cast %31 : vector<1x8xi32> to vector<8xi32>
    %33 = vector.shape_cast %32 : vector<8xi32> to vector<8x1xi32>
    %34 = vector.broadcast %33 : vector<8x1xi32> to vector<8x8xi32>
    %35 = arith.cmpi eq, %34, %0 : vector<8x8xi32>
    %36 = arith.extui %35 : vector<8x8xi1> to vector<8x8xi32>
    %37 = arith.sitofp %36 : vector<8x8xi32> to vector<8x8xf32>
    %c3_15 = arith.constant 3 : index
    %c0_16 = arith.constant 0 : index
    %c0_17 = arith.constant 0 : index
    %38 = vector.load %arg3[%c3_15, %c0_16, %c0_17] : memref<4x8x32xf32, #tpu.memory_space<vmem>>, vector<1x8x32xf32>
    %39 = vector.shape_cast %38 : vector<1x8x32xf32> to vector<8x32xf32>
    %cst_18 = arith.constant dense<0.000000e+00> : vector<8x32xf32>
    %40 = tpu.matmul %37, %39, %cst_18 {dimension_numbers = #tpu.dot_dimension_numbers<[1], [0], [0], [1], [0, 0, 1, 1], [], []>} : vector<8x8xf32>, vector<8x32xf32>, vector<8x32xf32> -> vector<8x32xf32>
    %41 = tpu.concatenate %10, %20, %30, %40 in 1 : vector<8x32xf32>, vector<8x32xf32>, vector<8x32xf32>, vector<8x32xf32> -> vector<8x128xf32>
    %c0_19 = arith.constant 0 : index
    %c0_20 = arith.constant 0 : index
    %42 = vector.load %arg4[%c0_19, %c0_20] : memref<8x128xf32, #tpu.memory_space<vmem>>, vector<8x128xf32>
    tpu.vector_store %arg4[%c0_19, %c0_20], %41 {strides = array<i32>} : memref<8x128xf32, #tpu.memory_space<vmem>>, vector<8x128xf32>,
    return
  }
  func.func @transform_0(%arg0: i32, %arg1: i32) -> (i32, i32) {
    %c0_i32 = arith.constant 0 : i32
    return %arg0, %arg1 : i32, i32
  }
  func.func @transform_1(%arg0: i32, %arg1: i32) -> (i32, i32, i32) {
    %c0_i32 = arith.constant 0 : i32
    %c0_i32_0 = arith.constant 0 : i32
    %c0_i32_1 = arith.constant 0 : i32
    return %arg0, %c0_i32, %c0_i32_0 : i32, i32, i32
  }
  func.func @transform_2(%arg0: i32, %arg1: i32) -> (i32, i32) {
    %c0_i32 = arith.constant 0 : i32
    return %arg1, %arg0 : i32, i32
  }
}

</mosaic_0001>

<llo_original>
// kernel: tpu_custom_call.1
$region0: #{tpu_custom_call.1}
  #allocation0 [shape = 'u32[]', space=smem, size = 0x4, offset = 0x4, fixed_abs, tag = 'smem constant byte address 0x4 - core index']
  #allocation1 [shape = 'u32[144,128]{1,0:T(1,128)}', space=vmem, size = 0x12000, scoped, tag = 'internal scratch']
  %s0 = inlined_call_operand.hbm [shape: s32[4,8], index: 0, kind: input, shape index: {}]
  %s1 = inlined_call_operand.hbm [shape: f32[4,8,32], index: 1, kind: input, shape index: {}]
  %s2 = inlined_call_operand.hbm [shape: f32[8,128], index: 2, kind: output, shape index: {}]
  %s3 = sld [smem:[#allocation0]]
  $region26: #{tpu_custom_call.1} parent=0
    _
  %s5 = ssub.s32 1, %s3
  %s6 = scalar_select 0, %s5, %s3
  $region1: #{tpu_custom_call.1} parent=0
    #allocation2 [shape = 'u8[2048]{0}', space=vmem, size = 0x800, scoped, tag = 'input window, operand 0, single buffered']
    #allocation3 [shape = 's32[1]{0}', space=sflag, size = 0x4, scoped, tag = 'scoped memory for tpu_custom_call.1']
    #allocation4 [shape = 's32[1]{0}', space=sflag, size = 0x4, scoped, tag = 'scoped memory for tpu_custom_call.1']
    #allocation5 [shape = 'u8[16384]{0}', space=vmem, size = 0x4000, scoped, tag = 'input window, operand 1, single buffered']
    #allocation6 [shape = 's32[1]{0}', space=sflag, size = 0x4, scoped, tag = 'scoped memory for tpu_custom_call.1']
    #allocation7 [shape = 'u8[4096]{0}', space=vmem, size = 0x1000, scoped, tag = 'output window, operand 0, single buffered']
    %7 = vsyncpa [#allocation3], 0
    %8 = vsyncpa [#allocation6], 0
    %9 = vsyncpa [#allocation4], 0
    // Predicated region
    $region2: #{tpu_custom_call.1} parent=1 // pred_check
      _
    $region3: #{tpu_custom_call.1} parent=1 // pred_check_branch
      %11 = sbr.rel (0) target = $region5
    $region4: #{tpu_custom_call.1} parent=1 // pred_region
      %s13 = ssub.s32 64, 64
      %14 = vsyncadd [#allocation3], %s13
      %s16 = sshll.u32 [#allocation2], 4
      %s17 = int_to_ptr.vmem [resolvable:$true] %s16
      %19 = dma.hbm_to_vmem [thread:$0]  %s0, 64, %s17, [#allocation3]
    $region5: #{tpu_custom_call.1} parent=1 // pred_fallthru
      _
    // Predicated region
    $region6: #{tpu_custom_call.1} parent=1 // pred_check
      _
    $region7: #{tpu_custom_call.1} parent=1 // pred_check_branch
      %21 = sbr.rel (0) target = $region9
    $region8: #{tpu_custom_call.1} parent=1 // pred_region
      %s23 = ssub.s32 512, 512
      %24 = vsyncadd [#allocation6], %s23
      %s25 = sshll.u32 [#allocation5], 4
      %s26 = int_to_ptr.vmem [resolvable:$true] %s25
      %31 = dma.hbm_to_vmem [thread:$0]  %s1, 512, %s26, [#allocation6], 128, 128, 8
    $region9: #{tpu_custom_call.1} parent=1 // pred_fallthru
      _
    // Predicated region
    $region10: #{tpu_custom_call.1} parent=1 // pred_check
      _
    $region11: #{tpu_custom_call.1} parent=1 // pred_check_branch
      %33 = sbr.rel (0) target = $region13
    $region12: #{tpu_custom_call.1} parent=1 // pred_region
      %34 = dma.done [#allocation3], 64
    $region13: #{tpu_custom_call.1} parent=1 // pred_fallthru
      _
    // Predicated region
    $region14: #{tpu_custom_call.1} parent=1 // pred_check
      _
    $region15: #{tpu_custom_call.1} parent=1 // pred_check_branch
      %36 = sbr.rel (0) target = $region17
    $region16: #{tpu_custom_call.1} parent=1 // pred_region
      %37 = dma.done [#allocation6], 512
    $region17: #{tpu_custom_call.1} parent=1 // pred_fallthru
      _
    %v38 = vlaneseq
    %v39 = vand.u32 %v38, 127
    %v40 = vld [vmem:[#allocation2] sm:$0x1]
    %v41 = vlaneseq
    %v42 = vshrl.u32 %v41, 7
    %v43 = vsub.s32 0, %v42
    %v44 = vrot.slane %v40, %v43
    %46 = vbcast.lane.b32.xlu0 %v44, 256
    %v47 = vpop.permute.xlu0 %46
    %vm48 = vcmp.eq.s32.totalorder %v47, %v39
    %v49 = vsel %vm48, 1, 0
    %v50 = vcvt.s32.f32 %v49
    %v51 = vld [vmem:[#allocation5] sm:$0xff]
    %vm52 = vcmask 64512
    %v54 = vsel %vm52, %v50, 0
    %56 = vmatprep.subr.mxu0 0.0
    %57 = vmatpush1.msra.mxu0 0.0
    %58 = vmatprep.subr.mxu0 0.0
    %59 = vmatpush1.msra.mxu0 0.0
    %60 = vmatprep.subr.mxu0 0.0
    %61 = vmatpush1.msra.mxu0 0.0
    %62 = vmatprep.subr.mxu0 0.0
    %63 = vmatpush1.msra.mxu0 0.0
    %64 = vmatprep.subr.mxu0 0.0
    %65 = vmatpush1.msra.mxu0 0.0
    %66 = vmatprep.subr.mxu0 0.0
    %67 = vmatpush1.msra.mxu0 0.0
    %68 = vmatprep.subr.mxu0 0.0
    %69 = vmatpush1.msra.mxu0 0.0
    %70 = vmatprep.subr.mxu0 0.0
    %71 = vmatpush1.msra.mxu0 0.0
    %72 = vmatprep.subr.mxu0 0.0
    %73 = vmatpush1.msra.mxu0 0.0
    %74 = vmatprep.subr.mxu0 0.0
    %75 = vmatpush1.msra.mxu0 0.0
    %76 = vmatprep.subr.mxu0 0.0
    %77 = vmatpush1.msra.mxu0 0.0
    %78 = vmatprep.subr.mxu0 0.0
    %79 = vmatpush1.msra.mxu0 0.0
    %80 = vmatprep.subr.mxu0 0.0
    %81 = vmatpush1.msra.mxu0 0.0
    %82 = vmatprep.subr.mxu0 0.0
    %83 = vmatpush1.msra.mxu0 0.0
    %84 = vmatprep.subr.mxu0 0.0
    %85 = vmatpush1.msra.mxu0 0.0
    %86 = vmatprep.subr.mxu0 0.0
    %87 = vmatpush1.msra.mxu0 %v51
    %88 = vmatprep.subr.mxu0 0.0
    %89 = vmatpush2.msra.mxu0 0.0
    %90 = vmatprep.subr.mxu0 0.0
    %91 = vmatpush2.msra.mxu0 0.0
    %92 = vmatprep.subr.mxu0 0.0
    %93 = vmatpush2.msra.mxu0 0.0
    %94 = vmatprep.subr.mxu0 0.0
    %95 = vmatpush2.msra.mxu0 0.0
    %96 = vmatprep.subr.mxu0 0.0
    %97 = vmatpush2.msra.mxu0 0.0
    %98 = vmatprep.subr.mxu0 0.0
    %99 = vmatpush2.msra.mxu0 0.0
    %100 = vmatprep.subr.mxu0 0.0
    %101 = vmatpush2.msra.mxu0 0.0
    %102 = vmatprep.subr.mxu0 0.0
    %103 = vmatpush2.msra.mxu0 0.0
    %104 = vmatprep.subr.mxu0 0.0
    %105 = vmatpush2.msra.mxu0 0.0
    %106 = vmatprep.subr.mxu0 0.0
    %107 = vmatpush2.msra.mxu0 0.0
    %108 = vmatprep.subr.mxu0 0.0
    %109 = vmatpush2.msra.mxu0 0.0
    %110 = vmatprep.subr.mxu0 0.0
    %111 = vmatpush2.msra.mxu0 0.0
    %112 = vmatprep.subr.mxu0 0.0
    %113 = vmatpush2.msra.mxu0 0.0
    %114 = vmatprep.subr.mxu0 0.0
    %115 = vmatpush2.msra.mxu0 0.0
    %116 = vmatprep.subr.mxu0 0.0
    %117 = vmatpush2.msra.mxu0 0.0
    %118 = vmatprep.subr.mxu0 0.0
    %119 = vmatpush2.msra.mxu0 0.0
    %120 = vmatprep.mubr.f32.mxu0 0.0
    %121 = vmatmul.mubr.f32.gmra.mxu0 %v54
    %v122 = vpop.f32.mrf.mxu0
    %v123 = vadd.f32 0.0, %v122
    %v124 = vpop.f32.mrf.mxu0
    %125 = vdwg.mxu0
    %v126 = vld [vmem:[#allocation2 + $0x1] sm:$0x1]
    %v127 = vlaneseq
    %v128 = vshrl.u32 %v127, 7
    %v129 = vsub.s32 0, %v128
    %v130 = vrot.slane %v126, %v129
    %132 = vbcast.lane.b32.xlu0 %v130, 256
    %v133 = vpop.permute.xlu0 %132
    %vm134 = vcmp.eq.s32.totalorder %v133, %v39
    %v135 = vsel %vm134, 1, 0
    %v136 = vcvt.s32.f32 %v135
    %s137 = scalar_lea.vmem [#allocation5], 8
    %v138 = vld [vmem:[%s137] sm:$0xff]
    %v140 = vsel %vm52, %v136, 0
    %142 = vmatprep.subr.mxu0 0.0
    %143 = vmatpush1.msra.mxu0 0.0
    %144 = vmatprep.subr.mxu0 0.0
    %145 = vmatpush1.msra.mxu0 0.0
    %146 = vmatprep.subr.mxu0 0.0
    %147 = vmatpush1.msra.mxu0 0.0
    %148 = vmatprep.subr.mxu0 0.0
    %149 = vmatpush1.msra.mxu0 0.0
    %150 = vmatprep.subr.mxu0 0.0
    %151 = vmatpush1.msra.mxu0 0.0
    %152 = vmatprep.subr.mxu0 0.0
    %153 = vmatpush1.msra.mxu0 0.0
    %154 = vmatprep.subr.mxu0 0.0
    %155 = vmatpush1.msra.mxu0 0.0
    %156 = vmatprep.subr.mxu0 0.0
    %157 = vmatpush1.msra.mxu0 0.0
    %158 = vmatprep.subr.mxu0 0.0
    %159 = vmatpush1.msra.mxu0 0.0
    %160 = vmatprep.subr.mxu0 0.0
    %161 = vmatpush1.msra.mxu0 0.0
    %162 = vmatprep.subr.mxu0 0.0
    %163 = vmatpush1.msra.mxu0 0.0
    %164 = vmatprep.subr.mxu0 0.0
    %165 = vmatpush1.msra.mxu0 0.0
    %166 = vmatprep.subr.mxu0 0.0
    %167 = vmatpush1.msra.mxu0 0.0
    %168 = vmatprep.subr.mxu0 0.0
    %169 = vmatpush1.msra.mxu0 0.0
    %170 = vmatprep.subr.mxu0 0.0
    %171 = vmatpush1.msra.mxu0 0.0
    %172 = vmatprep.subr.mxu0 0.0
    %173 = vmatpush1.msra.mxu0 %v138
    %174 = vmatprep.subr.mxu0 0.0
    %175 = vmatpush2.msra.mxu0 0.0
    %176 = vmatprep.subr.mxu0 0.0
    %177 = vmatpush2.msra.mxu0 0.0
    %178 = vmatprep.subr.mxu0 0.0
    %179 = vmatpush2.msra.mxu0 0.0
    %180 = vmatprep.subr.mxu0 0.0
    %181 = vmatpush2.msra.mxu0 0.0
    %182 = vmatprep.subr.mxu0 0.0
    %183 = vmatpush2.msra.mxu0 0.0
    %184 = vmatprep.subr.mxu0 0.0
    %185 = vmatpush2.msra.mxu0 0.0
    %186 = vmatprep.subr.mxu0 0.0
    %187 = vmatpush2.msra.mxu0 0.0
    %188 = vmatprep.subr.mxu0 0.0
    %189 = vmatpush2.msra.mxu0 0.0
    %190 = vmatprep.subr.mxu0 0.0
    %191 = vmatpush2.msra.mxu0 0.0
    %192 = vmatprep.subr.mxu0 0.0
    %193 = vmatpush2.msra.mxu0 0.0
    %194 = vmatprep.subr.mxu0 0.0
    %195 = vmatpush2.msra.mxu0 0.0
    %196 = vmatprep.subr.mxu0 0.0
    %197 = vmatpush2.msra.mxu0 0.0
    %198 = vmatprep.subr.mxu0 0.0
    %199 = vmatpush2.msra.mxu0 0.0
    %200 = vmatprep.subr.mxu0 0.0
    %201 = vmatpush2.msra.mxu0 0.0
    %202 = vmatprep.subr.mxu0 0.0
    %203 = vmatpush2.msra.mxu0 0.0
    %204 = vmatprep.subr.mxu0 0.0
    %205 = vmatpush2.msra.mxu0 0.0
    %206 = vmatprep.mubr.f32.mxu0 0.0
    %207 = vmatmul.mubr.f32.gmra.mxu0 %v140
    %v208 = vpop.f32.mrf.mxu0
    %v209 = vadd.f32 0.0, %v208
    %v210 = vpop.f32.mrf.mxu0
    %211 = vdwg.mxu0
    %v212 = vld [vmem:[#allocation2 + $0x2] sm:$0x1]
    %v213 = vlaneseq
    %v214 = vshrl.u32 %v213, 7
    %v215 = vsub.s32 0, %v214
    %v216 = vrot.slane %v212, %v215
    %218 = vbcast.lane.b32.xlu0 %v216, 256
    %v219 = vpop.permute.xlu0 %218
    %vm220 = vcmp.eq.s32.totalorder %v219, %v39
    %v221 = vsel %vm220, 1, 0
    %v222 = vcvt.s32.f32 %v221
    %s223 = scalar_lea.vmem [#allocation5], 16
    %v224 = vld [vmem:[%s223] sm:$0xff]
    %v226 = vsel %vm52, %v222, 0
    %228 = vmatprep.subr.mxu0 0.0
    %229 = vmatpush1.msra.mxu0 0.0
    %230 = vmatprep.subr.mxu0 0.0
    %231 = vmatpush1.msra.mxu0 0.0
    %232 = vmatprep.subr.mxu0 0.0
    %233 = vmatpush1.msra.mxu0 0.0
    %234 = vmatprep.subr.mxu0 0.0
    %235 = vmatpush1.msra.mxu0 0.0
    %236 = vmatprep.subr.mxu0 0.0
    %237 = vmatpush1.msra.mxu0 0.0
    %238 = vmatprep.subr.mxu0 0.0
    %239 = vmatpush1.msra.mxu0 0.0
    %240 = vmatprep.subr.mxu0 0.0
    %241 = vmatpush1.msra.mxu0 0.0
    %242 = vmatprep.subr.mxu0 0.0
    %243 = vmatpush1.msra.mxu0 0.0
    %244 = vmatprep.subr.mxu0 0.0
    %245 = vmatpush1.msra.mxu0 0.0
    %246 = vmatprep.subr.mxu0 0.0
    %247 = vmatpush1.msra.mxu0 0.0
    %248 = vmatprep.subr.mxu0 0.0
    %249 = vmatpush1.msra.mxu0 0.0
    %250 = vmatprep.subr.mxu0 0.0
    %251 = vmatpush1.msra.mxu0 0.0
    %252 = vmatprep.subr.mxu0 0.0
    %253 = vmatpush1.msra.mxu0 0.0
    %254 = vmatprep.subr.mxu0 0.0
    %255 = vmatpush1.msra.mxu0 0.0
    %256 = vmatprep.subr.mxu0 0.0
    %257 = vmatpush1.msra.mxu0 0.0
    %258 = vmatprep.subr.mxu0 0.0
    %259 = vmatpush1.msra.mxu0 %v224
    %260 = vmatprep.subr.mxu0 0.0
    %261 = vmatpush2.msra.mxu0 0.0
    %262 = vmatprep.subr.mxu0 0.0
    %263 = vmatpush2.msra.mxu0 0.0
    %264 = vmatprep.subr.mxu0 0.0
    %265 = vmatpush2.msra.mxu0 0.0
    %266 = vmatprep.subr.mxu0 0.0
    %267 = vmatpush2.msra.mxu0 0.0
    %268 = vmatprep.subr.mxu0 0.0
    %269 = vmatpush2.msra.mxu0 0.0
    %270 = vmatprep.subr.mxu0 0.0
    %271 = vmatpush2.msra.mxu0 0.0
    %272 = vmatprep.subr.mxu0 0.0
    %273 = vmatpush2.msra.mxu0 0.0
    %274 = vmatprep.subr.mxu0 0.0
    %275 = vmatpush2.msra.mxu0 0.0
    %276 = vmatprep.subr.mxu0 0.0
    %277 = vmatpush2.msra.mxu0 0.0
    %278 = vmatprep.subr.mxu0 0.0
    %279 = vmatpush2.msra.mxu0 0.0
    %280 = vmatprep.subr.mxu0 0.0
    %281 = vmatpush2.msra.mxu0 0.0
    %282 = vmatprep.subr.mxu0 0.0
    %283 = vmatpush2.msra.mxu0 0.0
    %284 = vmatprep.subr.mxu0 0.0
    %285 = vmatpush2.msra.mxu0 0.0
    %286 = vmatprep.subr.mxu0 0.0
    %287 = vmatpush2.msra.mxu0 0.0
    %288 = vmatprep.subr.mxu0 0.0
    %289 = vmatpush2.msra.mxu0 0.0
    %290 = vmatprep.subr.mxu0 0.0
    %291 = vmatpush2.msra.mxu0 0.0
    %292 = vmatprep.mubr.f32.mxu0 0.0
    %293 = vmatmul.mubr.f32.gmra.mxu0 %v226
    %v294 = vpop.f32.mrf.mxu0
    %v295 = vadd.f32 0.0, %v294
    %v296 = vpop.f32.mrf.mxu0
    %297 = vdwg.mxu0
    %v298 = vld [vmem:[#allocation2 + $0x3] sm:$0x1]
    %v299 = vlaneseq
    %v300 = vshrl.u32 %v299, 7
    %v301 = vsub.s32 0, %v300
    %v302 = vrot.slane %v298, %v301
    %304 = vbcast.lane.b32.xlu0 %v302, 256
    %v305 = vpop.permute.xlu0 %304
    %vm306 = vcmp.eq.s32.totalorder %v305, %v39
    %v307 = vsel %vm306, 1, 0
    %v308 = vcvt.s32.f32 %v307
    %s309 = scalar_lea.vmem [#allocation5], 24
    %v310 = vld [vmem:[%s309] sm:$0xff]
    %v312 = vsel %vm52, %v308, 0
    %314 = vmatprep.subr.mxu0 0.0
    %315 = vmatpush1.msra.mxu0 0.0
    %316 = vmatprep.subr.mxu0 0.0
    %317 = vmatpush1.msra.mxu0 0.0
    %318 = vmatprep.subr.mxu0 0.0
    %319 = vmatpush1.msra.mxu0 0.0
    %320 = vmatprep.subr.mxu0 0.0
    %321 = vmatpush1.msra.mxu0 0.0
    %322 = vmatprep.subr.mxu0 0.0
    %323 = vmatpush1.msra.mxu0 0.0
    %324 = vmatprep.subr.mxu0 0.0
    %325 = vmatpush1.msra.mxu0 0.0
    %326 = vmatprep.subr.mxu0 0.0
    %327 = vmatpush1.msra.mxu0 0.0
    %328 = vmatprep.subr.mxu0 0.0
    %329 = vmatpush1.msra.mxu0 0.0
    %330 = vmatprep.subr.mxu0 0.0
    %331 = vmatpush1.msra.mxu0 0.0
    %332 = vmatprep.subr.mxu0 0.0
    %333 = vmatpush1.msra.mxu0 0.0
    %334 = vmatprep.subr.mxu0 0.0
    %335 = vmatpush1.msra.mxu0 0.0
    %336 = vmatprep.subr.mxu0 0.0
    %337 = vmatpush1.msra.mxu0 0.0
    %338 = vmatprep.subr.mxu0 0.0
    %339 = vmatpush1.msra.mxu0 0.0
    %340 = vmatprep.subr.mxu0 0.0
    %341 = vmatpush1.msra.mxu0 0.0
    %342 = vmatprep.subr.mxu0 0.0
    %343 = vmatpush1.msra.mxu0 0.0
    %344 = vmatprep.subr.mxu0 0.0
    %345 = vmatpush1.msra.mxu0 %v310
    %346 = vmatprep.subr.mxu0 0.0
    %347 = vmatpush2.msra.mxu0 0.0
    %348 = vmatprep.subr.mxu0 0.0
    %349 = vmatpush2.msra.mxu0 0.0
    %350 = vmatprep.subr.mxu0 0.0
    %351 = vmatpush2.msra.mxu0 0.0
    %352 = vmatprep.subr.mxu0 0.0
    %353 = vmatpush2.msra.mxu0 0.0
    %354 = vmatprep.subr.mxu0 0.0
    %355 = vmatpush2.msra.mxu0 0.0
    %356 = vmatprep.subr.mxu0 0.0
    %357 = vmatpush2.msra.mxu0 0.0
    %358 = vmatprep.subr.mxu0 0.0
    %359 = vmatpush2.msra.mxu0 0.0
    %360 = vmatprep.subr.mxu0 0.0
    %361 = vmatpush2.msra.mxu0 0.0
    %362 = vmatprep.subr.mxu0 0.0
    %363 = vmatpush2.msra.mxu0 0.0
    %364 = vmatprep.subr.mxu0 0.0
    %365 = vmatpush2.msra.mxu0 0.0
    %366 = vmatprep.subr.mxu0 0.0
    %367 = vmatpush2.msra.mxu0 0.0
    %368 = vmatprep.subr.mxu0 0.0
    %369 = vmatpush2.msra.mxu0 0.0
    %370 = vmatprep.subr.mxu0 0.0
    %371 = vmatpush2.msra.mxu0 0.0
    %372 = vmatprep.subr.mxu0 0.0
    %373 = vmatpush2.msra.mxu0 0.0
    %374 = vmatprep.subr.mxu0 0.0
    %375 = vmatpush2.msra.mxu0 0.0
    %376 = vmatprep.subr.mxu0 0.0
    %377 = vmatpush2.msra.mxu0 0.0
    %378 = vmatprep.mubr.f32.mxu0 0.0
    %379 = vmatmul.mubr.f32.gmra.mxu0 %v312
    %v380 = vpop.f32.mrf.mxu0
    %v381 = vadd.f32 0.0, %v380
    %v382 = vpop.f32.mrf.mxu0
    %383 = vdwg.mxu0
    %385 = vrot.lane.b32.xlu0 %v209, 32
    %v386 = vpop.permute.xlu0 %385
    %389 = vrot.lane.b32.xlu0 %v295, 64
    %v390 = vpop.permute.xlu0 %389
    %393 = vrot.lane.b32.xlu0 %v381, 96
    %v394 = vpop.permute.xlu0 %393
    %vm396 = vcmask 261120
    %v397 = vsel %vm396, %v123, %v386
    %vm398 = vcmask 523264
    %v399 = vsel %vm398, %v397, %v390
    %vm400 = vcmask 785408
    %v401 = vsel %vm400, %v399, %v394
    %402 = vst [vmem:[#allocation7] sm:$0xff] %v401
    // Predicated region
    $region18: #{tpu_custom_call.1} parent=1 // pred_check
      _
    $region19: #{tpu_custom_call.1} parent=1 // pred_check_branch
      %404 = sbr.rel (0) target = $region21
    $region20: #{tpu_custom_call.1} parent=1 // pred_region
      %s406 = ssub.s32 128, 128
      %407 = vsyncadd [#allocation4], %s406
      %s409 = sshll.u32 [#allocation7], 4
      %s410 = int_to_ptr.vmem [resolvable:$true] %s409
      %412 = dma.vmem_to_hbm [thread:$0]  %s410, 128, %s2, [#allocation4]
    $region21: #{tpu_custom_call.1} parent=1 // pred_fallthru
      _
    // Predicated region
    $region22: #{tpu_custom_call.1} parent=1 // pred_check
      _
    $region23: #{tpu_custom_call.1} parent=1 // pred_check_branch
      %414 = sbr.rel (0) target = $region25
    $region24: #{tpu_custom_call.1} parent=1 // pred_region
      %415 = dma.done [#allocation4], 128
    $region25: #{tpu_custom_call.1} parent=1 // pred_fallthru
      _
    %416 = vsyncpa [#allocation3], 1
    %417 = vsyncpa [#allocation6], 1
    %418 = vsyncpa [#allocation4], 1

</llo_original>
